<compile_context>
chip_gen: v7x
topology: tpu7x:2x2x1
jax: 0.10.0
libtpu: 0.0.40
codegen_flags: <defaults>
</compile_context>

<pallas_src>
import jax
import jax.numpy as jnp
from jax.experimental import pallas as pl
from jax.experimental.pallas import tpu as pltpu

N_STATES = 4      # CartPole-v1 observation dim
N_ACTIONS = 2     # CartPole-v1 action count
FC1_UNITS = 1000

HID_PAD = 1024    # hidden 1000 -> 1024 (lane multiple)
OUT_PAD = 8       # padded out-dim used only for the W2 MXU tile
BATCH_TILE = 256  # batch tile for the large-batch (training) grid path


def _net_kernel(x_ref, w1_ref, b1_ref, w2_ref, b2_ref, o_ref):
    # fc1 on the MXU: bf16 x bf16 -> f32 accumulate (MXU zero-pads K=4 internally).
    xb = x_ref[...].astype(jnp.bfloat16)                       # (B, 4)
    h = jnp.dot(xb, w1_ref[...],
                preferred_element_type=jnp.float32) + b1_ref[...]   # (B, HID_PAD) f32

    # sigmoid with a single EUP push per vreg: sigmoid(h) = 0.5*tanh(0.5*h) + 0.5
    s = 0.5 * jnp.tanh(0.5 * h) + 0.5

    # out layer on the MXU: bf16 x bf16 -> f32 accumulate.
    y = jnp.dot(s.astype(jnp.bfloat16), w2_ref[...],
                preferred_element_type=jnp.float32)            # (B, OUT_PAD) f32

    # slice the padded output columns away in-kernel; store (B, N_ACTIONS) directly
    o_ref[...] = y[:, :N_ACTIONS] + b2_ref[...]


def prepare_params(w1, b1, w2, b2):
    """Pad + cast parameters ONCE (at init / after each optimizer step).
    w1: (N_STATES, FC1_UNITS), b1: (FC1_UNITS,), w2: (FC1_UNITS, N_ACTIONS), b2: (N_ACTIONS,)
    Weights stored bf16 (MXU-native, halves DMA); biases stay f32.
    NOTE: run BOTH the online and the target network through this so TD targets
    see the same bf16 weight quantization."""
    w1p = jnp.zeros((N_STATES, HID_PAD), jnp.bfloat16)
    w1p = w1p.at[:, :FC1_UNITS].set(w1.astype(jnp.bfloat16))
    b1p = jnp.zeros((1, HID_PAD), jnp.float32).at[0, :FC1_UNITS].set(b1)
    w2p = jnp.zeros((HID_PAD, OUT_PAD), jnp.bfloat16)
    w2p = w2p.at[:FC1_UNITS, :N_ACTIONS].set(w2.astype(jnp.bfloat16))
    b2p = b2.reshape(1, N_ACTIONS).astype(jnp.float32)
    return w1p, b1p, w2p, b2p


@jax.jit
def net_forward(x, w1p, b1p, w2p, b2p):
    """x: (B, N_STATES) f32 (unpadded); padded params from prepare_params.
    Returns (B, N_ACTIONS) f32 Q-values."""
    B = x.shape[0]
    cost = pl.CostEstimate(
        flops=2 * B * HID_PAD * (N_STATES + OUT_PAD),
        transcendentals=B * HID_PAD,
        bytes_accessed=(B * N_STATES * 4 + N_STATES * HID_PAD * 2 + HID_PAD * 4
                        + HID_PAD * OUT_PAD * 2 + N_ACTIONS * 4 + B * N_ACTIONS * 4),
    )
    out_shape = jax.ShapeDtypeStruct((B, N_ACTIONS), jnp.float32)

    if B >= 2 * BATCH_TILE and B % BATCH_TILE == 0:
        # Large training batch: parallel batch grid axis (both TCs on v7x).
        # A (BATCH_TILE, HID_PAD) f32 hidden is ~1 MiB -> trivially fits VMEM on
        # v5e/v6e (128 MiB) and v7x (64 MiB).
        nb = B // BATCH_TILE
        return pl.pallas_call(
            _net_kernel,
            out_shape=out_shape,
            grid=(nb,),
            in_specs=[
                pl.BlockSpec((BATCH_TILE, N_STATES), lambda i: (i, 0)),
                pl.BlockSpec((N_STATES, HID_PAD), lambda i: (0, 0)),
                pl.BlockSpec((1, HID_PAD), lambda i: (0, 0)),
                pl.BlockSpec((HID_PAD, OUT_PAD), lambda i: (0, 0)),
                pl.BlockSpec((1, N_ACTIONS), lambda i: (0, 0)),
            ],
            out_specs=pl.BlockSpec((BATCH_TILE, N_ACTIONS), lambda i: (i, 0)),
            compiler_params=pltpu.CompilerParams(
                dimension_semantics=("parallel",)),
            cost_estimate=cost,
        )(x, w1p, b1p, w2p, b2p)

    # Single-env-step inference: one grid step, full-array blocks,
    # no wrapper padding and no output slicing.
    full = lambda shape: pl.BlockSpec(shape, lambda: (0,) * len(shape))
    return pl.pallas_call(
        _net_kernel,
        out_shape=out_shape,
        grid=(),
        in_specs=[
            full((B, N_STATES)),
            full((N_STATES, HID_PAD)),
            full((1, HID_PAD)),
            full((HID_PAD, OUT_PAD)),
            full((1, N_ACTIONS)),
        ],
        out_specs=full((B, N_ACTIONS)),
        cost_estimate=cost,
    )(x, w1p, b1p, w2p, b2p)


@jax.jit
def _reference_forward(x, w1p, b1p, w2p, b2p):
    """Pure-JAX reference mirroring the kernel's quantization exactly."""
    h = jnp.dot(x.astype(jnp.bfloat16), w1p,
                preferred_element_type=jnp.float32) + b1p
    s = 0.5 * jnp.tanh(0.5 * h) + 0.5
    y = jnp.dot(s.astype(jnp.bfloat16), w2p,
                preferred_element_type=jnp.float32)
    return y[:, :N_ACTIONS] + b2p


def init_params(key):
    """Deterministic init mirroring the PyTorch module:
    weights ~ N(0,1) (nn.init.normal_), biases use PyTorch Linear's default
    uniform(-1/sqrt(fan_in), 1/sqrt(fan_in))."""
    k1, k2, k3, k4 = jax.random.split(key, 4)
    w1 = jax.random.normal(k1, (N_STATES, FC1_UNITS), jnp.float32)
    b1 = jax.random.uniform(k2, (FC1_UNITS,), jnp.float32,
                            minval=-1.0 / jnp.sqrt(N_STATES),
                            maxval=1.0 / jnp.sqrt(N_STATES))
    w2 = jax.random.normal(k3, (FC1_UNITS, N_ACTIONS), jnp.float32)
    b2 = jax.random.uniform(k4, (N_ACTIONS,), jnp.float32,
                            minval=-1.0 / jnp.sqrt(FC1_UNITS),
                            maxval=1.0 / jnp.sqrt(FC1_UNITS))
    return w1, b1, w2, b2


if __name__ == "__main__":
    key = jax.random.PRNGKey(0)
    kx, kp = jax.random.split(key)
    batch = 2
    x = jax.random.normal(kx, (batch, N_STATES), jnp.float32)
    w1, b1, w2, b2 = init_params(kp)

    # padding / bf16 cast happens once, outside the per-step forward
    params = prepare_params(w1, b1, w2, b2)

    # --- small (inference) batch: grid=() path ---
    q_values = net_forward(x, *params)
    jax.block_until_ready(q_values)
    assert q_values.shape == (batch, N_ACTIONS)

    ref_q = _reference_forward(x, *params)
    assert jnp.allclose(q_values, ref_q, atol=2e-2, rtol=2e-2), \
        float(jnp.max(jnp.abs(q_values - ref_q)))

    # loose sanity check vs. the full-f32 reference (difference = bf16 quantization)
    ref_f32 = jax.nn.sigmoid(x @ w1 + b1) @ w2 + b2
    assert jnp.allclose(q_values, ref_f32, atol=1.0, rtol=5e-2)

    # --- large (training) batch: parallel batch-grid path ---
    xb = jax.random.normal(jax.random.PRNGKey(1), (512, N_STATES), jnp.float32)
    qb = net_forward(xb, *params)
    jax.block_until_ready(qb)
    assert qb.shape == (512, N_ACTIONS)
    ref_b = _reference_forward(xb, *params)
    assert jnp.allclose(qb, ref_b, atol=2e-2, rtol=2e-2), \
        float(jnp.max(jnp.abs(qb - ref_b)))

    print("KERNEL_OK")
</pallas_src>

<mosaic_0001>
module attributes {stable_mosaic.version = 11 : i64} {
  func.func @_net_kernel(%arg0: memref<2x4xf32, #tpu.memory_space<vmem>>, %arg1: memref<4x1024xbf16, #tpu.memory_space<vmem>>, %arg2: memref<1x1024xf32, #tpu.memory_space<vmem>>, %arg3: memref<1024x8xbf16, #tpu.memory_space<vmem>>, %arg4: memref<1x2xf32, #tpu.memory_space<vmem>>, %arg5: memref<2x2xf32, #tpu.memory_space<vmem>>) attributes {dimension_semantics = [], scalar_prefetch = 0 : i64, scratch_operands = 0 : i64, tpu.core_type = #tpu.core_type<tc>} {
    %c0 = arith.constant 0 : index
    %c0_0 = arith.constant 0 : index
    %0 = vector.load %arg0[%c0, %c0_0] : memref<2x4xf32, #tpu.memory_space<vmem>>, vector<2x4xf32>
    %1 = arith.truncf %0 : vector<2x4xf32> to vector<2x4xbf16>
    %c0_1 = arith.constant 0 : index
    %c0_2 = arith.constant 0 : index
    %2 = vector.load %arg1[%c0_1, %c0_2] : memref<4x1024xbf16, #tpu.memory_space<vmem>>, vector<4x1024xbf16>
    %cst = arith.constant dense<0.000000e+00> : vector<2x1024xf32>
    %3 = tpu.matmul %1, %2, %cst {dimension_numbers = #tpu.dot_dimension_numbers<[1], [0], [0], [1], [0, 0, 1, 1], [], []>} : vector<2x4xbf16>, vector<4x1024xbf16>, vector<2x1024xf32> -> vector<2x1024xf32>
    %c0_3 = arith.constant 0 : index
    %c0_4 = arith.constant 0 : index
    %4 = vector.load %arg2[%c0_3, %c0_4] : memref<1x1024xf32, #tpu.memory_space<vmem>>, vector<1x1024xf32>
    %5 = vector.broadcast %4 : vector<1x1024xf32> to vector<2x1024xf32>
    %6 = arith.addf %3, %5 : vector<2x1024xf32>
    %cst_5 = arith.constant 5.000000e-01 : f32
    %7 = vector.broadcast %cst_5 : f32 to vector<2x1024xf32>
    %8 = arith.mulf %7, %6 : vector<2x1024xf32>
    %9 = math.tanh %8 : vector<2x1024xf32>
    %cst_6 = arith.constant 5.000000e-01 : f32
    %10 = vector.broadcast %cst_6 : f32 to vector<2x1024xf32>
    %11 = arith.mulf %10, %9 : vector<2x1024xf32>
    %cst_7 = arith.constant 5.000000e-01 : f32
    %12 = vector.broadcast %cst_7 : f32 to vector<2x1024xf32>
    %13 = arith.addf %11, %12 : vector<2x1024xf32>
    %14 = arith.truncf %13 : vector<2x1024xf32> to vector<2x1024xbf16>
    %c0_8 = arith.constant 0 : index
    %c0_9 = arith.constant 0 : index
    %15 = vector.load %arg3[%c0_8, %c0_9] : memref<1024x8xbf16, #tpu.memory_space<vmem>>, vector<1024x8xbf16>
    %cst_10 = arith.constant dense<0.000000e+00> : vector<2x8xf32>
    %16 = tpu.matmul %14, %15, %cst_10 {dimension_numbers = #tpu.dot_dimension_numbers<[1], [0], [0], [1], [0, 0, 1, 1], [], []>} : vector<2x1024xbf16>, vector<1024x8xbf16>, vector<2x8xf32> -> vector<2x8xf32>
    %17 = vector.extract_strided_slice %16 {offsets = [0, 0], sizes = [2, 2], strides = [1, 1]} : vector<2x8xf32> to vector<2x2xf32>
    %c0_11 = arith.constant 0 : index
    %c0_12 = arith.constant 0 : index
    %18 = vector.load %arg4[%c0_11, %c0_12] : memref<1x2xf32, #tpu.memory_space<vmem>>, vector<1x2xf32>
    %19 = vector.broadcast %18 : vector<1x2xf32> to vector<2x2xf32>
    %20 = arith.addf %17, %19 : vector<2x2xf32>
    %c0_13 = arith.constant 0 : index
    %c0_14 = arith.constant 0 : index
    %21 = vector.load %arg5[%c0_13, %c0_14] : memref<2x2xf32, #tpu.memory_space<vmem>>, vector<2x2xf32>
    tpu.vector_store %arg5[%c0_13, %c0_14], %20 {strides = array<i32>} : memref<2x2xf32, #tpu.memory_space<vmem>>, vector<2x2xf32>,
    return
  }
}

</mosaic_0001>

<llo_original>
// kernel: net_forward.1
$region0: #{net_forward.1}
  #allocation0 [shape = 'u32[]', space=smem, size = 0x4, offset = 0x4, fixed_abs, tag = 'smem constant byte address 0x4 - core index']
  #allocation1 [shape = 'u32[144,128]{1,0:T(1,128)}', space=vmem, size = 0x12000, scoped, tag = 'internal scratch']
  %s0 = inlined_call_operand.vmem [shape: f32[2,4], index: 0, kind: input, shape index: {}]
  %s1 = inlined_call_operand.vmem [shape: bf16[4,1024], index: 1, kind: input, shape index: {}]
  %s2 = inlined_call_operand.vmem [shape: f32[1,1024], index: 2, kind: input, shape index: {}]
  %s3 = inlined_call_operand.vmem [shape: bf16[1024,8], index: 3, kind: input, shape index: {}]
  %s4 = inlined_call_operand.vmem [shape: f32[1,2], index: 4, kind: input, shape index: {}]
  %s5 = inlined_call_operand.hbm [shape: f32[2,2], index: 5, kind: output, shape index: {}]
  %s6 = sld [smem:[#allocation0]]
  $region30: #{net_forward.1} parent=0
    _
  %s8 = ssub.s32 1, %s6
  %s9 = scalar_select 0, %s8, %s6
  $region1: #{net_forward.1} parent=0
    #allocation2 [shape = 'u8[1024]{0}', space=vmem, size = 0x400, scoped, tag = 'output window, operand 0, single buffered']
    #allocation3 [shape = 's32[1]{0}', space=sflag, size = 0x4, scoped, tag = 'scoped memory for net_forward.1']
    %10 = vsyncpa [#allocation3], 0
    // Predicated region
    $region2: #{net_forward.1} parent=1 // pred_check
      _
    $region3: #{net_forward.1} parent=1 // pred_check_branch
      %12 = sbr.rel (0) target = $region5
    $region4: #{net_forward.1} parent=1 // pred_region
      _
    $region5: #{net_forward.1} parent=1 // pred_fallthru
      _
    // Predicated region
    $region6: #{net_forward.1} parent=1 // pred_check
      _
    $region7: #{net_forward.1} parent=1 // pred_check_branch
      %14 = sbr.rel (0) target = $region9
    $region8: #{net_forward.1} parent=1 // pred_region
      _
    $region9: #{net_forward.1} parent=1 // pred_fallthru
      _
    // Predicated region
    $region10: #{net_forward.1} parent=1 // pred_check
      _
    $region11: #{net_forward.1} parent=1 // pred_check_branch
      %16 = sbr.rel (0) target = $region13
    $region12: #{net_forward.1} parent=1 // pred_region
      _
    $region13: #{net_forward.1} parent=1 // pred_fallthru
      _
    // Predicated region
    $region14: #{net_forward.1} parent=1 // pred_check
      _
    $region15: #{net_forward.1} parent=1 // pred_check_branch
      %18 = sbr.rel (0) target = $region17
    $region16: #{net_forward.1} parent=1 // pred_region
      _
    $region17: #{net_forward.1} parent=1 // pred_fallthru
      _
    // Predicated region
    $region18: #{net_forward.1} parent=1 // pred_check
      _
    $region19: #{net_forward.1} parent=1 // pred_check_branch
      %20 = sbr.rel (0) target = $region21
    $region20: #{net_forward.1} parent=1 // pred_region
      _
    $region21: #{net_forward.1} parent=1 // pred_fallthru
      _
    %v22 = vld [vmem:[%s0] sm:$0x3]
    %v23 = vpack.c.bf16 %v22, %v22
    %v24 = vld [vmem:[%s1] sm:$0xff]
    %v25 = vld [vmem:[%s1 + $0x8] sm:$0xff]
    %v26 = vld [vmem:[%s2] sm:$0xff]
    %v28 = vlaneseq
    %v29 = vshrl.u32 %v28, 7
    %v30 = vsub.s32 0, %v29
    %v31 = vrot.slane %v26, %v30
    %v32 = vlaneseq
    %v33 = vshrl.u32 %v32, 7
    %v34 = vsub.s32 1, %v33
    %v35 = vrot.slane %v26, %v34
    %v36 = vlaneseq
    %v37 = vshrl.u32 %v36, 7
    %v38 = vsub.s32 2, %v37
    %v39 = vrot.slane %v26, %v38
    %v40 = vlaneseq
    %v41 = vshrl.u32 %v40, 7
    %v42 = vsub.s32 3, %v41
    %v43 = vrot.slane %v26, %v42
    %v44 = vlaneseq
    %v45 = vshrl.u32 %v44, 7
    %v46 = vsub.s32 4, %v45
    %v47 = vrot.slane %v26, %v46
    %v48 = vlaneseq
    %v49 = vshrl.u32 %v48, 7
    %v50 = vsub.s32 5, %v49
    %v51 = vrot.slane %v26, %v50
    %v52 = vlaneseq
    %v53 = vshrl.u32 %v52, 7
    %v54 = vsub.s32 6, %v53
    %v55 = vrot.slane %v26, %v54
    %v56 = vlaneseq
    %v57 = vshrl.u32 %v56, 7
    %v58 = vsub.s32 7, %v57
    %v59 = vrot.slane %v26, %v58
    %v70 = vcombine.high %v24, %v24
    %v72 = vunpack.c.l.s4 1983009808
    %v73 = vunpack.c.0.s8 %v72
    %v74 = vlaneseq
    %v75 = vshrl.u32 %v74, 7
    %v76 = vsub.s32 %v73, %v75
    %v77 = vrot.slane %v24, %v76
    %v79 = vunpack.c.l.s4 1983009808
    %v80 = vunpack.c.0.s8 %v79
    %v81 = vlaneseq
    %v82 = vshrl.u32 %v81, 7
    %v83 = vsub.s32 %v80, %v82
    %v84 = vrot.slane %v70, %v83
    %v85 = vcombine.high %v77, %v77
    %v86 = vcombine.high %v84, %v84
    %v87 = vcombine.high %v25, %v25
    %v89 = vunpack.c.l.s4 1983009808
    %v90 = vunpack.c.0.s8 %v89
    %v91 = vlaneseq
    %v92 = vshrl.u32 %v91, 7
    %v93 = vsub.s32 %v90, %v92
    %v94 = vrot.slane %v25, %v93
    %v96 = vunpack.c.l.s4 1983009808
    %v97 = vunpack.c.0.s8 %v96
    %v98 = vlaneseq
    %v99 = vshrl.u32 %v98, 7
    %v100 = vsub.s32 %v97, %v99
    %v101 = vrot.slane %v87, %v100
    %v102 = vcombine.high %v94, %v94
    %v103 = vcombine.high %v101, %v101
    %vm104 = vcmask 31744
    %v106 = vsel %vm104, %v23, 0
    %vm108 = vcmask 1041408
    %v110 = vsel %vm108, %v77, 0
    %v113 = vsel %vm108, %v85, 0
    %v116 = vsel %vm108, %v84, 0
    %v119 = vsel %vm108, %v86, 0
    %v122 = vsel %vm108, %v94, 0
    %v125 = vsel %vm108, %v102, 0
    %v128 = vsel %vm108, %v101, 0
    %v131 = vsel %vm108, %v103, 0
    %133 = vmatprep.subr.bf16.mxu0 %v113
    %134 = vmatpush1.bf16.msra.mxu0 %v110
    %135 = vmatprep.subr.bf16.mxu0 0
    %136 = vmatpush1.bf16.msra.mxu0 0
    %137 = vmatprep.subr.bf16.mxu0 0
    %138 = vmatpush1.bf16.msra.mxu0 0
    %139 = vmatprep.subr.bf16.mxu0 0
    %140 = vmatpush1.bf16.msra.mxu0 0
    %141 = vmatprep.subr.bf16.mxu0 0
    %142 = vmatpush1.bf16.msra.mxu0 0
    %143 = vmatprep.subr.bf16.mxu0 0
    %144 = vmatpush1.bf16.msra.mxu0 0
    %145 = vmatprep.subr.bf16.mxu0 0
    %146 = vmatpush1.bf16.msra.mxu0 0
    %147 = vmatprep.subr.bf16.mxu0 0
    %148 = vmatpush1.bf16.msra.mxu0 0
    %149 = vmatprep.subr.bf16.mxu0 0
    %150 = vmatpush1.bf16.msra.mxu0 0
    %151 = vmatprep.subr.bf16.mxu0 0
    %152 = vmatpush1.bf16.msra.mxu0 0
    %153 = vmatprep.subr.bf16.mxu0 0
    %154 = vmatpush1.bf16.msra.mxu0 0
    %155 = vmatprep.subr.bf16.mxu0 0
    %156 = vmatpush1.bf16.msra.mxu0 0
    %157 = vmatprep.subr.bf16.mxu0 0
    %158 = vmatpush1.bf16.msra.mxu0 0
    %159 = vmatprep.subr.bf16.mxu0 0
    %160 = vmatpush1.bf16.msra.mxu0 0
    %161 = vmatprep.subr.bf16.mxu0 0
    %162 = vmatpush1.bf16.msra.mxu0 0
    %163 = vmatprep.subr.bf16.mxu0 0
    %164 = vmatpush1.bf16.msra.mxu0 0
    %165 = vmatprep.mubr.bf16.mxu0 0
    %166 = vmatmul.mubr.bf16.gmra.mrb[0].mxu0 %v106
    %v167 = vpop.f32.mrb[0].mxu0
    %v168 = vadd.f32 %v31, %v167
    %v169 = vpop.f32.mrb[0].mxu0
    %v170 = vadd.f32 %v35, %v169
    %v171 = vpop.f32.mrb[0].mxu0
    %v172 = vpop.f32.mrb[0].mxu0
    %173 = vdwg.mxu0
    %174 = vmatprep.subr.bf16.mxu0 %v119
    %175 = vmatpush1.bf16.msra.mxu0 %v116
    %176 = vmatprep.subr.bf16.mxu0 0
    %177 = vmatpush1.bf16.msra.mxu0 0
    %178 = vmatprep.subr.bf16.mxu0 0
    %179 = vmatpush1.bf16.msra.mxu0 0
    %180 = vmatprep.subr.bf16.mxu0 0
    %181 = vmatpush1.bf16.msra.mxu0 0
    %182 = vmatprep.subr.bf16.mxu0 0
    %183 = vmatpush1.bf16.msra.mxu0 0
    %184 = vmatprep.subr.bf16.mxu0 0
    %185 = vmatpush1.bf16.msra.mxu0 0
    %186 = vmatprep.subr.bf16.mxu0 0
    %187 = vmatpush1.bf16.msra.mxu0 0
    %188 = vmatprep.subr.bf16.mxu0 0
    %189 = vmatpush1.bf16.msra.mxu0 0
    %190 = vmatprep.subr.bf16.mxu0 0
    %191 = vmatpush1.bf16.msra.mxu0 0
    %192 = vmatprep.subr.bf16.mxu0 0
    %193 = vmatpush1.bf16.msra.mxu0 0
    %194 = vmatprep.subr.bf16.mxu0 0
    %195 = vmatpush1.bf16.msra.mxu0 0
    %196 = vmatprep.subr.bf16.mxu0 0
    %197 = vmatpush1.bf16.msra.mxu0 0
    %198 = vmatprep.subr.bf16.mxu0 0
    %199 = vmatpush1.bf16.msra.mxu0 0
    %200 = vmatprep.subr.bf16.mxu0 0
    %201 = vmatpush1.bf16.msra.mxu0 0
    %202 = vmatprep.subr.bf16.mxu0 0
    %203 = vmatpush1.bf16.msra.mxu0 0
    %204 = vmatprep.subr.bf16.mxu0 0
    %205 = vmatpush1.bf16.msra.mxu0 0
    %206 = vmatprep.mubr.bf16.mxu0 0
    %207 = vmatmul.mubr.bf16.gmra.mrb[0].mxu0 %v106
    %v208 = vpop.f32.mrb[0].mxu0
    %v209 = vadd.f32 %v39, %v208
    %v210 = vpop.f32.mrb[0].mxu0
    %v211 = vadd.f32 %v43, %v210
    %v212 = vpop.f32.mrb[0].mxu0
    %v213 = vpop.f32.mrb[0].mxu0
    %214 = vdwg.mxu0
    %215 = vmatprep.subr.bf16.mxu0 %v125
    %216 = vmatpush1.bf16.msra.mxu0 %v122
    %217 = vmatprep.subr.bf16.mxu0 0
    %218 = vmatpush1.bf16.msra.mxu0 0
    %219 = vmatprep.subr.bf16.mxu0 0
    %220 = vmatpush1.bf16.msra.mxu0 0
    %221 = vmatprep.subr.bf16.mxu0 0
    %222 = vmatpush1.bf16.msra.mxu0 0
    %223 = vmatprep.subr.bf16.mxu0 0
    %224 = vmatpush1.bf16.msra.mxu0 0
    %225 = vmatprep.subr.bf16.mxu0 0
    %226 = vmatpush1.bf16.msra.mxu0 0
    %227 = vmatprep.subr.bf16.mxu0 0
    %228 = vmatpush1.bf16.msra.mxu0 0
    %229 = vmatprep.subr.bf16.mxu0 0
    %230 = vmatpush1.bf16.msra.mxu0 0
    %231 = vmatprep.subr.bf16.mxu0 0
    %232 = vmatpush1.bf16.msra.mxu0 0
    %233 = vmatprep.subr.bf16.mxu0 0
    %234 = vmatpush1.bf16.msra.mxu0 0
    %235 = vmatprep.subr.bf16.mxu0 0
    %236 = vmatpush1.bf16.msra.mxu0 0
    %237 = vmatprep.subr.bf16.mxu0 0
    %238 = vmatpush1.bf16.msra.mxu0 0
    %239 = vmatprep.subr.bf16.mxu0 0
    %240 = vmatpush1.bf16.msra.mxu0 0
    %241 = vmatprep.subr.bf16.mxu0 0
    %242 = vmatpush1.bf16.msra.mxu0 0
    %243 = vmatprep.subr.bf16.mxu0 0
    %244 = vmatpush1.bf16.msra.mxu0 0
    %245 = vmatprep.subr.bf16.mxu0 0
    %246 = vmatpush1.bf16.msra.mxu0 0
    %247 = vmatprep.mubr.bf16.mxu0 0
    %248 = vmatmul.mubr.bf16.gmra.mrb[0].mxu0 %v106
    %v249 = vpop.f32.mrb[0].mxu0
    %v250 = vadd.f32 %v47, %v249
    %v251 = vpop.f32.mrb[0].mxu0
    %v252 = vadd.f32 %v51, %v251
    %v253 = vpop.f32.mrb[0].mxu0
    %v254 = vpop.f32.mrb[0].mxu0
    %255 = vdwg.mxu0
    %256 = vmatprep.subr.bf16.mxu0 %v131
    %257 = vmatpush1.bf16.msra.mxu0 %v128
    %258 = vmatprep.subr.bf16.mxu0 0
    %259 = vmatpush1.bf16.msra.mxu0 0
    %260 = vmatprep.subr.bf16.mxu0 0
    %261 = vmatpush1.bf16.msra.mxu0 0
    %262 = vmatprep.subr.bf16.mxu0 0
    %263 = vmatpush1.bf16.msra.mxu0 0
    %264 = vmatprep.subr.bf16.mxu0 0
    %265 = vmatpush1.bf16.msra.mxu0 0
    %266 = vmatprep.subr.bf16.mxu0 0
    %267 = vmatpush1.bf16.msra.mxu0 0
    %268 = vmatprep.subr.bf16.mxu0 0
    %269 = vmatpush1.bf16.msra.mxu0 0
    %270 = vmatprep.subr.bf16.mxu0 0
    %271 = vmatpush1.bf16.msra.mxu0 0
    %272 = vmatprep.subr.bf16.mxu0 0
    %273 = vmatpush1.bf16.msra.mxu0 0
    %274 = vmatprep.subr.bf16.mxu0 0
    %275 = vmatpush1.bf16.msra.mxu0 0
    %276 = vmatprep.subr.bf16.mxu0 0
    %277 = vmatpush1.bf16.msra.mxu0 0
    %278 = vmatprep.subr.bf16.mxu0 0
    %279 = vmatpush1.bf16.msra.mxu0 0
    %280 = vmatprep.subr.bf16.mxu0 0
    %281 = vmatpush1.bf16.msra.mxu0 0
    %282 = vmatprep.subr.bf16.mxu0 0
    %283 = vmatpush1.bf16.msra.mxu0 0
    %284 = vmatprep.subr.bf16.mxu0 0
    %285 = vmatpush1.bf16.msra.mxu0 0
    %286 = vmatprep.subr.bf16.mxu0 0
    %287 = vmatpush1.bf16.msra.mxu0 0
    %288 = vmatprep.mubr.bf16.mxu0 0
    %289 = vmatmul.mubr.bf16.gmra.mrb[0].mxu0 %v106
    %v290 = vpop.f32.mrb[0].mxu0
    %v291 = vadd.f32 %v55, %v290
    %v292 = vpop.f32.mrb[0].mxu0
    %v293 = vadd.f32 %v59, %v292
    %v294 = vpop.f32.mrb[0].mxu0
    %v295 = vpop.f32.mrb[0].mxu0
    %296 = vdwg.mxu0
    %v297 = vmul.f32 %v168, 0.5
    %v298 = vmul.f32 %v170, 0.5
    %v299 = vmul.f32 %v209, 0.5
    %v300 = vmul.f32 %v211, 0.5
    %v301 = vmul.f32 %v250, 0.5
    %v302 = vmul.f32 %v252, 0.5
    %v303 = vmul.f32 %v291, 0.5
    %v304 = vmul.f32 %v293, 0.5
    %v305 = vtanh.pop %v297
    %v306 = vtanh.pop %v298
    %v307 = vtanh.pop %v299
    %v308 = vtanh.pop %v300
    %v309 = vtanh.pop %v301
    %v310 = vtanh.pop %v302
    %v311 = vtanh.pop %v303
    %v312 = vtanh.pop %v304
    %v313 = vmul.f32 %v305, 0.5
    %v314 = vmul.f32 %v306, 0.5
    %v315 = vmul.f32 %v307, 0.5
    %v316 = vmul.f32 %v308, 0.5
    %v317 = vmul.f32 %v309, 0.5
    %v318 = vmul.f32 %v310, 0.5
    %v319 = vmul.f32 %v311, 0.5
    %v320 = vmul.f32 %v312, 0.5
    %v321 = vadd.f32 %v313, 0.5
    %v322 = vadd.f32 %v314, 0.5
    %v323 = vadd.f32 %v315, 0.5
    %v324 = vadd.f32 %v316, 0.5
    %v325 = vadd.f32 %v317, 0.5
    %v326 = vadd.f32 %v318, 0.5
    %v327 = vadd.f32 %v319, 0.5
    %v328 = vadd.f32 %v320, 0.5
    %v329 = vpack.c.bf16 %v321, %v321
    %v330 = vpack.c.bf16 %v322, %v322
    %v331 = vpack.c.bf16 %v323, %v323
    %v332 = vpack.c.bf16 %v324, %v324
    %v333 = vpack.c.bf16 %v325, %v325
    %v334 = vpack.c.bf16 %v326, %v326
    %v335 = vpack.c.bf16 %v327, %v327
    %v336 = vpack.c.bf16 %v328, %v328
    %v337 = vld [vmem:[%s3] sm:$0xf]
    %v338 = vld [vmem:[%s3 + $0x4] sm:$0xf]
    %v339 = vld [vmem:[%s3 + $0x8] sm:$0xf]
    %v340 = vld [vmem:[%s3 + $0xc] sm:$0xf]
    %v341 = vld [vmem:[%s3 + $0x10] sm:$0xf]
    %v342 = vld [vmem:[%s3 + $0x14] sm:$0xf]
    %v343 = vld [vmem:[%s3 + $0x18] sm:$0xf]
    %v344 = vld [vmem:[%s3 + $0x1c] sm:$0xf]
    %v345 = vld [vmem:[%s3 + $0x20] sm:$0xf]
    %v346 = vld [vmem:[%s3 + $0x24] sm:$0xf]
    %v347 = vld [vmem:[%s3 + $0x28] sm:$0xf]
    %v348 = vld [vmem:[%s3 + $0x2c] sm:$0xf]
    %v349 = vld [vmem:[%s3 + $0x30] sm:$0xf]
    %v350 = vld [vmem:[%s3 + $0x34] sm:$0xf]
    %v351 = vld [vmem:[%s3 + $0x38] sm:$0xf]
    %v352 = vld [vmem:[%s3 + $0x3c] sm:$0xf]
    %v353 = vld [vmem:[%s3 + $0x40] sm:$0xf]
    %v354 = vld [vmem:[%s3 + $0x44] sm:$0xf]
    %v355 = vld [vmem:[%s3 + $0x48] sm:$0xf]
    %v356 = vld [vmem:[%s3 + $0x4c] sm:$0xf]
    %v357 = vld [vmem:[%s3 + $0x50] sm:$0xf]
    %v358 = vld [vmem:[%s3 + $0x54] sm:$0xf]
    %v359 = vld [vmem:[%s3 + $0x58] sm:$0xf]
    %v360 = vld [vmem:[%s3 + $0x5c] sm:$0xf]
    %v361 = vld [vmem:[%s3 + $0x60] sm:$0xf]
    %v362 = vld [vmem:[%s3 + $0x64] sm:$0xf]
    %v363 = vld [vmem:[%s3 + $0x68] sm:$0xf]
    %v364 = vld [vmem:[%s3 + $0x6c] sm:$0xf]
    %v365 = vld [vmem:[%s3 + $0x70] sm:$0xf]
    %v366 = vld [vmem:[%s3 + $0x74] sm:$0xf]
    %v367 = vld [vmem:[%s3 + $0x78] sm:$0xf]
    %v368 = vld [vmem:[%s3 + $0x7c] sm:$0xf]
    %v369 = vld [vmem:[%s3 + $0x80] sm:$0xf]
    %v370 = vld [vmem:[%s3 + $0x84] sm:$0xf]
    %v371 = vld [vmem:[%s3 + $0x88] sm:$0xf]
    %v372 = vld [vmem:[%s3 + $0x8c] sm:$0xf]
    %v373 = vld [vmem:[%s3 + $0x90] sm:$0xf]
    %v374 = vld [vmem:[%s3 + $0x94] sm:$0xf]
    %v375 = vld [vmem:[%s3 + $0x98] sm:$0xf]
    %v376 = vld [vmem:[%s3 + $0x9c] sm:$0xf]
    %v377 = vld [vmem:[%s3 + $0xa0] sm:$0xf]
    %v378 = vld [vmem:[%s3 + $0xa4] sm:$0xf]
    %v379 = vld [vmem:[%s3 + $0xa8] sm:$0xf]
    %v380 = vld [vmem:[%s3 + $0xac] sm:$0xf]
    %v381 = vld [vmem:[%s3 + $0xb0] sm:$0xf]
    %v382 = vld [vmem:[%s3 + $0xb4] sm:$0xf]
    %v383 = vld [vmem:[%s3 + $0xb8] sm:$0xf]
    %v384 = vld [vmem:[%s3 + $0xbc] sm:$0xf]
    %v385 = vld [vmem:[%s3 + $0xc0] sm:$0xf]
    %v386 = vld [vmem:[%s3 + $0xc4] sm:$0xf]
    %v387 = vld [vmem:[%s3 + $0xc8] sm:$0xf]
    %v388 = vld [vmem:[%s3 + $0xcc] sm:$0xf]
    %v389 = vld [vmem:[%s3 + $0xd0] sm:$0xf]
    %v390 = vld [vmem:[%s3 + $0xd4] sm:$0xf]
    %v391 = vld [vmem:[%s3 + $0xd8] sm:$0xf]
    %v392 = vld [vmem:[%s3 + $0xdc] sm:$0xf]
    %v393 = vld [vmem:[%s3 + $0xe0] sm:$0xf]
    %v394 = vld [vmem:[%s3 + $0xe4] sm:$0xf]
    %v395 = vld [vmem:[%s3 + $0xe8] sm:$0xf]
    %v396 = vld [vmem:[%s3 + $0xec] sm:$0xf]
    %v397 = vld [vmem:[%s3 + $0xf0] sm:$0xf]
    %v398 = vld [vmem:[%s3 + $0xf4] sm:$0xf]
    %v399 = vld [vmem:[%s3 + $0xf8] sm:$0xf]
    %v400 = vld [vmem:[%s3 + $0xfc] sm:$0xf]
    %v401 = vld [vmem:[%s3 + $0x100] sm:$0xf]
    %v402 = vld [vmem:[%s3 + $0x104] sm:$0xf]
    %v403 = vld [vmem:[%s3 + $0x108] sm:$0xf]
    %v404 = vld [vmem:[%s3 + $0x10c] sm:$0xf]
    %v405 = vld [vmem:[%s3 + $0x110] sm:$0xf]
    %v406 = vld [vmem:[%s3 + $0x114] sm:$0xf]
    %v407 = vld [vmem:[%s3 + $0x118] sm:$0xf]
    %v408 = vld [vmem:[%s3 + $0x11c] sm:$0xf]
    %v409 = vld [vmem:[%s3 + $0x120] sm:$0xf]
    %v410 = vld [vmem:[%s3 + $0x124] sm:$0xf]
    %v411 = vld [vmem:[%s3 + $0x128] sm:$0xf]
    %v412 = vld [vmem:[%s3 + $0x12c] sm:$0xf]
    %v413 = vld [vmem:[%s3 + $0x130] sm:$0xf]
    %v414 = vld [vmem:[%s3 + $0x134] sm:$0xf]
    %v415 = vld [vmem:[%s3 + $0x138] sm:$0xf]
    %v416 = vld [vmem:[%s3 + $0x13c] sm:$0xf]
    %v417 = vld [vmem:[%s3 + $0x140] sm:$0xf]
    %v418 = vld [vmem:[%s3 + $0x144] sm:$0xf]
    %v419 = vld [vmem:[%s3 + $0x148] sm:$0xf]
    %v420 = vld [vmem:[%s3 + $0x14c] sm:$0xf]
    %v421 = vld [vmem:[%s3 + $0x150] sm:$0xf]
    %v422 = vld [vmem:[%s3 + $0x154] sm:$0xf]
    %v423 = vld [vmem:[%s3 + $0x158] sm:$0xf]
    %v424 = vld [vmem:[%s3 + $0x15c] sm:$0xf]
    %v425 = vld [vmem:[%s3 + $0x160] sm:$0xf]
    %v426 = vld [vmem:[%s3 + $0x164] sm:$0xf]
    %v427 = vld [vmem:[%s3 + $0x168] sm:$0xf]
    %v428 = vld [vmem:[%s3 + $0x16c] sm:$0xf]
    %v429 = vld [vmem:[%s3 + $0x170] sm:$0xf]
    %v430 = vld [vmem:[%s3 + $0x174] sm:$0xf]
    %v431 = vld [vmem:[%s3 + $0x178] sm:$0xf]
    %v432 = vld [vmem:[%s3 + $0x17c] sm:$0xf]
    %v433 = vld [vmem:[%s3 + $0x180] sm:$0xf]
    %v434 = vld [vmem:[%s3 + $0x184] sm:$0xf]
    %v435 = vld [vmem:[%s3 + $0x188] sm:$0xf]
    %v436 = vld [vmem:[%s3 + $0x18c] sm:$0xf]
    %v437 = vld [vmem:[%s3 + $0x190] sm:$0xf]
    %v438 = vld [vmem:[%s3 + $0x194] sm:$0xf]
    %v439 = vld [vmem:[%s3 + $0x198] sm:$0xf]
    %v440 = vld [vmem:[%s3 + $0x19c] sm:$0xf]
    %v441 = vld [vmem:[%s3 + $0x1a0] sm:$0xf]
    %v442 = vld [vmem:[%s3 + $0x1a4] sm:$0xf]
    %v443 = vld [vmem:[%s3 + $0x1a8] sm:$0xf]
    %v444 = vld [vmem:[%s3 + $0x1ac] sm:$0xf]
    %v445 = vld [vmem:[%s3 + $0x1b0] sm:$0xf]
    %v446 = vld [vmem:[%s3 + $0x1b4] sm:$0xf]
    %v447 = vld [vmem:[%s3 + $0x1b8] sm:$0xf]
    %v448 = vld [vmem:[%s3 + $0x1bc] sm:$0xf]
    %v449 = vld [vmem:[%s3 + $0x1c0] sm:$0xf]
    %v450 = vld [vmem:[%s3 + $0x1c4] sm:$0xf]
    %v451 = vld [vmem:[%s3 + $0x1c8] sm:$0xf]
    %v452 = vld [vmem:[%s3 + $0x1cc] sm:$0xf]
    %v453 = vld [vmem:[%s3 + $0x1d0] sm:$0xf]
    %v454 = vld [vmem:[%s3 + $0x1d4] sm:$0xf]
    %v455 = vld [vmem:[%s3 + $0x1d8] sm:$0xf]
    %v456 = vld [vmem:[%s3 + $0x1dc] sm:$0xf]
    %v457 = vld [vmem:[%s3 + $0x1e0] sm:$0xf]
    %v458 = vld [vmem:[%s3 + $0x1e4] sm:$0xf]
    %v459 = vld [vmem:[%s3 + $0x1e8] sm:$0xf]
    %v460 = vld [vmem:[%s3 + $0x1ec] sm:$0xf]
    %v461 = vld [vmem:[%s3 + $0x1f0] sm:$0xf]
    %v462 = vld [vmem:[%s3 + $0x1f4] sm:$0xf]
    %v463 = vld [vmem:[%s3 + $0x1f8] sm:$0xf]
    %v464 = vld [vmem:[%s3 + $0x1fc] sm:$0xf]
    %v593 = vunpack.c.l.b16 %v337
    %v594 = vunpack.c.l.b16 %v338
    %v595 = vunpack.c.l.b16 %v339
    %v596 = vunpack.c.l.b16 %v340
    %v597 = vunpack.c.l.b16 %v341
    %v598 = vunpack.c.l.b16 %v342
    %v599 = vunpack.c.l.b16 %v343
    %v600 = vunpack.c.l.b16 %v344
    %v601 = vunpack.c.l.b16 %v345
    %v602 = vunpack.c.l.b16 %v346
    %v603 = vunpack.c.l.b16 %v347
    %v604 = vunpack.c.l.b16 %v348
    %v605 = vunpack.c.l.b16 %v349
    %v606 = vunpack.c.l.b16 %v350
    %v607 = vunpack.c.l.b16 %v351
    %v608 = vunpack.c.l.b16 %v352
    %v609 = vunpack.c.l.b16 %v353
    %v610 = vunpack.c.l.b16 %v354
    %v611 = vunpack.c.l.b16 %v355
    %v612 = vunpack.c.l.b16 %v356
    %v613 = vunpack.c.l.b16 %v357
    %v614 = vunpack.c.l.b16 %v358
    %v615 = vunpack.c.l.b16 %v359
    %v616 = vunpack.c.l.b16 %v360
    %v617 = vunpack.c.l.b16 %v361
    %v618 = vunpack.c.l.b16 %v362
    %v619 = vunpack.c.l.b16 %v363
    %v620 = vunpack.c.l.b16 %v364
    %v621 = vunpack.c.l.b16 %v365
    %v622 = vunpack.c.l.b16 %v366
    %v623 = vunpack.c.l.b16 %v367
    %v624 = vunpack.c.l.b16 %v368
    %v625 = vunpack.c.l.b16 %v369
    %v626 = vunpack.c.l.b16 %v370
    %v627 = vunpack.c.l.b16 %v371
    %v628 = vunpack.c.l.b16 %v372
    %v629 = vunpack.c.l.b16 %v373
    %v630 = vunpack.c.l.b16 %v374
    %v631 = vunpack.c.l.b16 %v375
    %v632 = vunpack.c.l.b16 %v376
    %v633 = vunpack.c.l.b16 %v377
    %v634 = vunpack.c.l.b16 %v378
    %v635 = vunpack.c.l.b16 %v379
    %v636 = vunpack.c.l.b16 %v380
    %v637 = vunpack.c.l.b16 %v381
    %v638 = vunpack.c.l.b16 %v382
    %v639 = vunpack.c.l.b16 %v383
    %v640 = vunpack.c.l.b16 %v384
    %v641 = vunpack.c.l.b16 %v385
    %v642 = vunpack.c.l.b16 %v386
    %v643 = vunpack.c.l.b16 %v387
    %v644 = vunpack.c.l.b16 %v388
    %v645 = vunpack.c.l.b16 %v389
    %v646 = vunpack.c.l.b16 %v390
    %v647 = vunpack.c.l.b16 %v391
    %v648 = vunpack.c.l.b16 %v392
    %v649 = vunpack.c.l.b16 %v393
    %v650 = vunpack.c.l.b16 %v394
    %v651 = vunpack.c.l.b16 %v395
    %v652 = vunpack.c.l.b16 %v396
    %v653 = vunpack.c.l.b16 %v397
    %v654 = vunpack.c.l.b16 %v398
    %v655 = vunpack.c.l.b16 %v399
    %v656 = vunpack.c.l.b16 %v400
    %v657 = vunpack.c.l.b16 %v401
    %v658 = vunpack.c.l.b16 %v402
    %v659 = vunpack.c.l.b16 %v403
    %v660 = vunpack.c.l.b16 %v404
    %v661 = vunpack.c.l.b16 %v405
    %v662 = vunpack.c.l.b16 %v406
    %v663 = vunpack.c.l.b16 %v407
    %v664 = vunpack.c.l.b16 %v408
    %v665 = vunpack.c.l.b16 %v409
    %v666 = vunpack.c.l.b16 %v410
    %v667 = vunpack.c.l.b16 %v411
    %v668 = vunpack.c.l.b16 %v412
    %v669 = vunpack.c.l.b16 %v413
    %v670 = vunpack.c.l.b16 %v414
    %v671 = vunpack.c.l.b16 %v415
    %v672 = vunpack.c.l.b16 %v416
    %v673 = vunpack.c.l.b16 %v417
    %v674 = vunpack.c.l.b16 %v418
    %v675 = vunpack.c.l.b16 %v419
    %v676 = vunpack.c.l.b16 %v420
    %v677 = vunpack.c.l.b16 %v421
    %v678 = vunpack.c.l.b16 %v422
    %v679 = vunpack.c.l.b16 %v423
    %v680 = vunpack.c.l.b16 %v424
    %v681 = vunpack.c.l.b16 %v425
    %v682 = vunpack.c.l.b16 %v426
    %v683 = vunpack.c.l.b16 %v427
    %v684 = vunpack.c.l.b16 %v428
    %v685 = vunpack.c.l.b16 %v429
    %v686 = vunpack.c.l.b16 %v430
    %v687 = vunpack.c.l.b16 %v431
    %v688 = vunpack.c.l.b16 %v432
    %v689 = vunpack.c.l.b16 %v433
    %v690 = vunpack.c.l.b16 %v434
    %v691 = vunpack.c.l.b16 %v435
    %v692 = vunpack.c.l.b16 %v436
    %v693 = vunpack.c.l.b16 %v437
    %v694 = vunpack.c.l.b16 %v438
    %v695 = vunpack.c.l.b16 %v439
    %v696 = vunpack.c.l.b16 %v440
    %v697 = vunpack.c.l.b16 %v441
    %v698 = vunpack.c.l.b16 %v442
    %v699 = vunpack.c.l.b16 %v443
    %v700 = vunpack.c.l.b16 %v444
    %v701 = vunpack.c.l.b16 %v445
    %v702 = vunpack.c.l.b16 %v446
    %v703 = vunpack.c.l.b16 %v447
    %v704 = vunpack.c.l.b16 %v448
    %v705 = vunpack.c.l.b16 %v449
    %v706 = vunpack.c.l.b16 %v450
    %v707 = vunpack.c.l.b16 %v451
    %v708 = vunpack.c.l.b16 %v452
    %v709 = vunpack.c.l.b16 %v453
    %v710 = vunpack.c.l.b16 %v454
    %v711 = vunpack.c.l.b16 %v455
    %v712 = vunpack.c.l.b16 %v456
    %v713 = vunpack.c.l.b16 %v457
    %v714 = vunpack.c.l.b16 %v458
    %v715 = vunpack.c.l.b16 %v459
    %v716 = vunpack.c.l.b16 %v460
    %v717 = vunpack.c.l.b16 %v461
    %v718 = vunpack.c.l.b16 %v462
    %v719 = vunpack.c.l.b16 %v463
    %v720 = vunpack.c.l.b16 %v464
    %v721 = vpack.c.b16 %v594, %v593
    %v722 = vpack.c.b16 %v596, %v595
    %v723 = vpack.c.b16 %v598, %v597
    %v724 = vpack.c.b16 %v600, %v599
    %v725 = vpack.c.b16 %v602, %v601
    %v726 = vpack.c.b16 %v604, %v603
    %v727 = vpack.c.b16 %v606, %v605
    %v728 = vpack.c.b16 %v608, %v607
    %v729 = vpack.c.b16 %v610, %v609
    %v730 = vpack.c.b16 %v612, %v611
    %v731 = vpack.c.b16 %v614, %v613
    %v732 = vpack.c.b16 %v616, %v615
    %v733 = vpack.c.b16 %v618, %v617
    %v734 = vpack.c.b16 %v620, %v619
    %v735 = vpack.c.b16 %v622, %v621
    %v736 = vpack.c.b16 %v624, %v623
    %v737 = vpack.c.b16 %v626, %v625
    %v738 = vpack.c.b16 %v628, %v627
    %v739 = vpack.c.b16 %v630, %v629
    %v740 = vpack.c.b16 %v632, %v631
    %v741 = vpack.c.b16 %v634, %v633
    %v742 = vpack.c.b16 %v636, %v635
    %v743 = vpack.c.b16 %v638, %v637
    %v744 = vpack.c.b16 %v640, %v639
    %v745 = vpack.c.b16 %v642, %v641
    %v746 = vpack.c.b16 %v644, %v643
    %v747 = vpack.c.b16 %v646, %v645
    %v748 = vpack.c.b16 %v648, %v647
    %v749 = vpack.c.b16 %v650, %v649
    %v750 = vpack.c.b16 %v652, %v651
    %v751 = vpack.c.b16 %v654, %v653
    %v752 = vpack.c.b16 %v656, %v655
    %v753 = vpack.c.b16 %v658, %v657
    %v754 = vpack.c.b16 %v660, %v659
    %v755 = vpack.c.b16 %v662, %v661
    %v756 = vpack.c.b16 %v664, %v663
    %v757 = vpack.c.b16 %v666, %v665
    %v758 = vpack.c.b16 %v668, %v667
    %v759 = vpack.c.b16 %v670, %v669
    %v760 = vpack.c.b16 %v672, %v671
    %v761 = vpack.c.b16 %v674, %v673
    %v762 = vpack.c.b16 %v676, %v675
    %v763 = vpack.c.b16 %v678, %v677
    %v764 = vpack.c.b16 %v680, %v679
    %v765 = vpack.c.b16 %v682, %v681
    %v766 = vpack.c.b16 %v684, %v683
    %v767 = vpack.c.b16 %v686, %v685
    %v768 = vpack.c.b16 %v688, %v687
    %v769 = vpack.c.b16 %v690, %v689
    %v770 = vpack.c.b16 %v692, %v691
    %v771 = vpack.c.b16 %v694, %v693
    %v772 = vpack.c.b16 %v696, %v695
    %v773 = vpack.c.b16 %v698, %v697
    %v774 = vpack.c.b16 %v700, %v699
    %v775 = vpack.c.b16 %v702, %v701
    %v776 = vpack.c.b16 %v704, %v703
    %v777 = vpack.c.b16 %v706, %v705
    %v778 = vpack.c.b16 %v708, %v707
    %v779 = vpack.c.b16 %v710, %v709
    %v780 = vpack.c.b16 %v712, %v711
    %v781 = vpack.c.b16 %v714, %v713
    %v782 = vpack.c.b16 %v716, %v715
    %v783 = vpack.c.b16 %v718, %v717
    %v784 = vpack.c.b16 %v720, %v719
    %849 = vmatprep.subr.bf16.mxu0 0
    %850 = vmatpush1.bf16.msra.mxu0 %v721
    %851 = vmatprep.subr.bf16.mxu0 0
    %852 = vmatpush1.bf16.msra.mxu0 %v722
    %853 = vmatprep.subr.bf16.mxu0 0
    %854 = vmatpush1.bf16.msra.mxu0 %v723
    %855 = vmatprep.subr.bf16.mxu0 0
    %856 = vmatpush1.bf16.msra.mxu0 %v724
    %857 = vmatprep.subr.bf16.mxu0 0
    %858 = vmatpush1.bf16.msra.mxu0 %v725
    %859 = vmatprep.subr.bf16.mxu0 0
    %860 = vmatpush1.bf16.msra.mxu0 %v726
    %861 = vmatprep.subr.bf16.mxu0 0
    %862 = vmatpush1.bf16.msra.mxu0 %v727
    %863 = vmatprep.subr.bf16.mxu0 0
    %864 = vmatpush1.bf16.msra.mxu0 %v728
    %865 = vmatprep.subr.bf16.mxu0 0
    %866 = vmatpush1.bf16.msra.mxu0 %v729
    %867 = vmatprep.subr.bf16.mxu0 0
    %868 = vmatpush1.bf16.msra.mxu0 %v730
    %869 = vmatprep.subr.bf16.mxu0 0
    %870 = vmatpush1.bf16.msra.mxu0 %v731
    %871 = vmatprep.subr.bf16.mxu0 0
    %872 = vmatpush1.bf16.msra.mxu0 %v732
    %873 = vmatprep.subr.bf16.mxu0 0
    %874 = vmatpush1.bf16.msra.mxu0 %v733
    %875 = vmatprep.subr.bf16.mxu0 0
    %876 = vmatpush1.bf16.msra.mxu0 %v734
    %877 = vmatprep.subr.bf16.mxu0 0
    %878 = vmatpush1.bf16.msra.mxu0 %v735
    %879 = vmatprep.subr.bf16.mxu0 0
    %880 = vmatpush1.bf16.msra.mxu0 %v736
    %881 = vmatprep.mubr.bf16.mxu0 %v330
    %882 = vmatmul.mubr.bf16.gmra.mrb[0].mxu0 %v329
    %v883 = vpop.f32.mrb[0].mxu0
    %v884 = vadd.f32 0.0, %v883
    %v885 = vpop.f32.mrb[0].mxu0
    %v886 = vpop.f32.mrb[0].mxu0
    %v887 = vpop.f32.mrb[0].mxu0
    %888 = vdwg.mxu0
    %889 = vmatprep.subr.bf16.mxu0 0
    %890 = vmatpush1.bf16.msra.mxu0 %v737
    %891 = vmatprep.subr.bf16.mxu0 0
    %892 = vmatpush1.bf16.msra.mxu0 %v738
    %893 = vmatprep.subr.bf16.mxu0 0
    %894 = vmatpush1.bf16.msra.mxu0 %v739
    %895 = vmatprep.subr.bf16.mxu0 0
    %896 = vmatpush1.bf16.msra.mxu0 %v740
    %897 = vmatprep.subr.bf16.mxu0 0
    %898 = vmatpush1.bf16.msra.mxu0 %v741
    %899 = vmatprep.subr.bf16.mxu0 0
    %900 = vmatpush1.bf16.msra.mxu0 %v742
    %901 = vmatprep.subr.bf16.mxu0 0
    %902 = vmatpush1.bf16.msra.mxu0 %v743
    %903 = vmatprep.subr.bf16.mxu0 0
    %904 = vmatpush1.bf16.msra.mxu0 %v744
    %905 = vmatprep.subr.bf16.mxu0 0
    %906 = vmatpush1.bf16.msra.mxu0 %v745
    %907 = vmatprep.subr.bf16.mxu0 0
    %908 = vmatpush1.bf16.msra.mxu0 %v746
    %909 = vmatprep.subr.bf16.mxu0 0
    %910 = vmatpush1.bf16.msra.mxu0 %v747
    %911 = vmatprep.subr.bf16.mxu0 0
    %912 = vmatpush1.bf16.msra.mxu0 %v748
    %913 = vmatprep.subr.bf16.mxu0 0
    %914 = vmatpush1.bf16.msra.mxu0 %v749
    %915 = vmatprep.subr.bf16.mxu0 0
    %916 = vmatpush1.bf16.msra.mxu0 %v750
    %917 = vmatprep.subr.bf16.mxu0 0
    %918 = vmatpush1.bf16.msra.mxu0 %v751
    %919 = vmatprep.subr.bf16.mxu0 0
    %920 = vmatpush1.bf16.msra.mxu0 %v752
    %921 = vmatprep.mubr.bf16.mxu0 %v332
    %922 = vmatmul.mubr.bf16.gmra.mrb[0].mxu0 %v331
    %v923 = vpop.f32.mrb[0].mxu0
    %v924 = vadd.f32 %v884, %v923
    %v925 = vpop.f32.mrb[0].mxu0
    %v926 = vpop.f32.mrb[0].mxu0
    %v927 = vpop.f32.mrb[0].mxu0
    %928 = vdwg.mxu0
    %929 = vmatprep.subr.bf16.mxu0 0
    %930 = vmatpush1.bf16.msra.mxu0 %v753
    %931 = vmatprep.subr.bf16.mxu0 0
    %932 = vmatpush1.bf16.msra.mxu0 %v754
    %933 = vmatprep.subr.bf16.mxu0 0
    %934 = vmatpush1.bf16.msra.mxu0 %v755
    %935 = vmatprep.subr.bf16.mxu0 0
    %936 = vmatpush1.bf16.msra.mxu0 %v756
    %937 = vmatprep.subr.bf16.mxu0 0
    %938 = vmatpush1.bf16.msra.mxu0 %v757
    %939 = vmatprep.subr.bf16.mxu0 0
    %940 = vmatpush1.bf16.msra.mxu0 %v758
    %941 = vmatprep.subr.bf16.mxu0 0
    %942 = vmatpush1.bf16.msra.mxu0 %v759
    %943 = vmatprep.subr.bf16.mxu0 0
    %944 = vmatpush1.bf16.msra.mxu0 %v760
    %945 = vmatprep.subr.bf16.mxu0 0
    %946 = vmatpush1.bf16.msra.mxu0 %v761
    %947 = vmatprep.subr.bf16.mxu0 0
    %948 = vmatpush1.bf16.msra.mxu0 %v762
    %949 = vmatprep.subr.bf16.mxu0 0
    %950 = vmatpush1.bf16.msra.mxu0 %v763
    %951 = vmatprep.subr.bf16.mxu0 0
    %952 = vmatpush1.bf16.msra.mxu0 %v764
    %953 = vmatprep.subr.bf16.mxu0 0
    %954 = vmatpush1.bf16.msra.mxu0 %v765
    %955 = vmatprep.subr.bf16.mxu0 0
    %956 = vmatpush1.bf16.msra.mxu0 %v766
    %957 = vmatprep.subr.bf16.mxu0 0
    %958 = vmatpush1.bf16.msra.mxu0 %v767
    %959 = vmatprep.subr.bf16.mxu0 0
    %960 = vmatpush1.bf16.msra.mxu0 %v768
    %961 = vmatprep.mubr.bf16.mxu0 %v334
    %962 = vmatmul.mubr.bf16.gmra.mrb[0].mxu0 %v333
    %v963 = vpop.f32.mrb[0].mxu0
    %v964 = vadd.f32 %v924, %v963
    %v965 = vpop.f32.mrb[0].mxu0
    %v966 = vpop.f32.mrb[0].mxu0
    %v967 = vpop.f32.mrb[0].mxu0
    %968 = vdwg.mxu0
    %969 = vmatprep.subr.bf16.mxu0 0
    %970 = vmatpush1.bf16.msra.mxu0 %v769
    %971 = vmatprep.subr.bf16.mxu0 0
    %972 = vmatpush1.bf16.msra.mxu0 %v770
    %973 = vmatprep.subr.bf16.mxu0 0
    %974 = vmatpush1.bf16.msra.mxu0 %v771
    %975 = vmatprep.subr.bf16.mxu0 0
    %976 = vmatpush1.bf16.msra.mxu0 %v772
    %977 = vmatprep.subr.bf16.mxu0 0
    %978 = vmatpush1.bf16.msra.mxu0 %v773
    %979 = vmatprep.subr.bf16.mxu0 0
    %980 = vmatpush1.bf16.msra.mxu0 %v774
    %981 = vmatprep.subr.bf16.mxu0 0
    %982 = vmatpush1.bf16.msra.mxu0 %v775
    %983 = vmatprep.subr.bf16.mxu0 0
    %984 = vmatpush1.bf16.msra.mxu0 %v776
    %985 = vmatprep.subr.bf16.mxu0 0
    %986 = vmatpush1.bf16.msra.mxu0 %v777
    %987 = vmatprep.subr.bf16.mxu0 0
    %988 = vmatpush1.bf16.msra.mxu0 %v778
    %989 = vmatprep.subr.bf16.mxu0 0
    %990 = vmatpush1.bf16.msra.mxu0 %v779
    %991 = vmatprep.subr.bf16.mxu0 0
    %992 = vmatpush1.bf16.msra.mxu0 %v780
    %993 = vmatprep.subr.bf16.mxu0 0
    %994 = vmatpush1.bf16.msra.mxu0 %v781
    %995 = vmatprep.subr.bf16.mxu0 0
    %996 = vmatpush1.bf16.msra.mxu0 %v782
    %997 = vmatprep.subr.bf16.mxu0 0
    %998 = vmatpush1.bf16.msra.mxu0 %v783
    %999 = vmatprep.subr.bf16.mxu0 0
    %1000 = vmatpush1.bf16.msra.mxu0 %v784
    %1001 = vmatprep.mubr.bf16.mxu0 %v336
    %1002 = vmatmul.mubr.bf16.gmra.mrb[0].mxu0 %v335
    %v1003 = vpop.f32.mrb[0].mxu0
    %v1004 = vadd.f32 %v964, %v1003
    %v1005 = vpop.f32.mrb[0].mxu0
    %v1006 = vpop.f32.mrb[0].mxu0
    %v1007 = vpop.f32.mrb[0].mxu0
    %1008 = vdwg.mxu0
    %v1009 = vld [vmem:[%s4] sm:$0x1]
    %v1011 = vlaneseq
    %v1012 = vshrl.u32 %v1011, 7
    %v1013 = vsub.s32 0, %v1012
    %v1014 = vrot.slane %v1009, %v1013
    %v1016 = vadd.f32 %v1004, %v1014
    %vm1017 = vcmask 9216
    %1018 = vst.msk [vmem:[#allocation2] sm:$0x3] %vm1017, %v1016
    // Predicated region
    $region22: #{net_forward.1} parent=1 // pred_check
      _
    $region23: #{net_forward.1} parent=1 // pred_check_branch
      %1020 = sbr.rel (0) target = $region25
    $region24: #{net_forward.1} parent=1 // pred_region
      %s1022 = ssub.s32 32, 32
      %1023 = vsyncadd [#allocation3], %s1022
      %s1025 = sshll.u32 [#allocation2], 4
      %s1026 = int_to_ptr.vmem [resolvable:$true] %s1025
      %1028 = dma.vmem_to_hbm [thread:$0]  %s1026, 32, %s5, [#allocation3]
    $region25: #{net_forward.1} parent=1 // pred_fallthru
      _
    // Predicated region
    $region26: #{net_forward.1} parent=1 // pred_check
      _
    $region27: #{net_forward.1} parent=1 // pred_check_branch
      %1030 = sbr.rel (0) target = $region29
    $region28: #{net_forward.1} parent=1 // pred_region
      %1031 = dma.done [#allocation3], 32
    $region29: #{net_forward.1} parent=1 // pred_fallthru
      _
    %1032 = vsyncpa [#allocation3], 1

</llo_original>
